<compile_context>
chip_gen: v5e
topology: v5e:2x2
jax: 0.10.0
libtpu: 0.0.40
codegen_flags: <defaults>
</compile_context>

<pallas_src>
import functools

import jax
import jax.numpy as jnp
from jax.experimental import pallas as pl
from jax.experimental.pallas import tpu as pltpu


# ---------------------------------------------------------------------------
# Kernel
# ---------------------------------------------------------------------------
def _count_enc_x2_kernel(p_ref, w1_ref, b1_ref, w2_ref, bout_ref,
                         out_ref, act_ref, *, dim_in):
    """One row-tile of MLPNodeCountEncoderX2.forward (inference).

    p_ref   : (tm, k_in_pad)  packed [x | counts_wl | counts_spasm | 0] (bf16)
    w1_ref  : (k_in_pad, H)   block-diagonal fused first Linears (bf16)
    b1_ref  : (1, H)          fused first biases (f32)
    w2_ref  : (k_act, E)      stacked [wx ; w2_w ; w2_s] in disjoint col blocks (bf16)
    bout_ref: (1, E)          [bx | b2_w | b2_s] (f32)
    act_ref : (tm, k_act)     VMEM scratch holding [x | relu_w | relu_s] (bf16)
    """
    f32 = jnp.float32
    p = p_ref[...]                                           # (tm, k_in_pad) bf16

    # Stage 1: block-diagonal first Linears of both count MLPs (raw BN and the
    # MLP-internal BN are already folded on the host), then ReLU.
    z = jnp.dot(p, w1_ref[...], preferred_element_type=f32) + b1_ref[...]
    z = jnp.maximum(z, 0.0)
    # TODO(synk): training-mode dropout after the ReLU is not emitted (inference).

    # Merged activation tile [x | relu_w | relu_s]; a single K=k_act matmul then
    # realises linear_x, both second Linears AND the final concat (the weights
    # live in disjoint row/column blocks of w2_ref), followed by one unmasked
    # lane-dense store of the (tm, dim_emb) output tile.
    act_ref[:, :dim_in] = p[:, :dim_in]
    act_ref[:, dim_in:] = z.astype(act_ref.dtype)
    y = jnp.dot(act_ref[...], w2_ref[...], preferred_element_type=f32)
    out_ref[...] = (y + bout_ref[...]).astype(out_ref.dtype)


# ---------------------------------------------------------------------------
# Wrapper
# ---------------------------------------------------------------------------
def _round_up(n, m):
    return (n + m - 1) // m * m


def pack_inputs(x, counts_wl, counts_spasm, *, dtype=jnp.bfloat16):
    """Pack [x | counts_wl | counts_spasm] into one lane-dense (N, k_pad) array.

    NOTE: ideally done once at data-prep time, not on every forward call
    (the concat is an extra HBM pass if done per step).
    """
    k_in = x.shape[1] + counts_wl.shape[1] + counts_spasm.shape[1]
    k_in_pad = _round_up(k_in, 128)
    packed = jnp.concatenate(
        [x.astype(dtype), counts_wl.astype(dtype), counts_spasm.astype(dtype)],
        axis=1)
    if k_in_pad != k_in:
        packed = jnp.pad(packed, ((0, 0), (0, k_in_pad - k_in)))
    return packed


def mlp_node_count_encoder_x2(packed, fused_params, *, tm=2048, min_steps=2,
                              out_dtype=None):
    """Pallas forward for MLPNodeCountEncoderX2 (inference).

    `packed` is the (N, k_in_pad) array from `pack_inputs`; `fused_params`
    comes from `fuse_params`.  Returns concat([linear_x(x), enc_w, enc_s], 1)
    of shape (N, dim_emb) in `out_dtype` (default: packed.dtype).
    """
    w1_blk, b1_cat, w2_stack, b_out = fused_params
    N, k_in_pad = packed.shape
    k_act, dim_emb = w2_stack.shape
    dim_hid = w1_blk.shape[1]
    dim_in = k_act - dim_hid
    assert w1_blk.shape[0] == k_in_pad
    assert b1_cat.shape == (1, dim_hid)
    assert b_out.shape == (1, dim_emb)
    if out_dtype is None:
        out_dtype = packed.dtype

    # Large row tiles (kernel is HBM-bandwidth-bound), but capped so the single
    # parallel grid axis has >= min_steps steps (v7x has 2 TensorCores; a
    # length-1 grid would leave one idle).  Tile rows stay a multiple of 8.
    tm_eff = min(int(tm), max(8, _round_up(pl.cdiv(N, min_steps), 8)))
    grid = (pl.cdiv(N, tm_eff),)          # ragged last block is masked by Pallas

    cost = pl.CostEstimate(
        flops=2 * N * (k_in_pad * dim_hid + k_act * dim_emb),
        transcendentals=0,
        bytes_accessed=(N * k_in_pad * packed.dtype.itemsize
                        + N * dim_emb * jnp.dtype(out_dtype).itemsize
                        + (k_in_pad * dim_hid + k_act * dim_emb)
                        * w2_stack.dtype.itemsize
                        + (dim_hid + dim_emb) * 4),
    )

    kernel = functools.partial(_count_enc_x2_kernel, dim_in=dim_in)

    return pl.pallas_call(
        kernel,
        out_shape=jax.ShapeDtypeStruct((N, dim_emb), out_dtype),
        grid_spec=pltpu.PrefetchScalarGridSpec(
            num_scalar_prefetch=0,
            grid=grid,
            in_specs=[
                pl.BlockSpec((tm_eff, k_in_pad), lambda i: (i, 0)),   # packed rows
                # Parameters: constant block index -> resident across the grid.
                pl.BlockSpec((k_in_pad, dim_hid), lambda i: (0, 0)),  # W1 block-diag
                pl.BlockSpec((1, dim_hid), lambda i: (0, 0)),         # b1
                pl.BlockSpec((k_act, dim_emb), lambda i: (0, 0)),     # W2 stacked
                pl.BlockSpec((1, dim_emb), lambda i: (0, 0)),         # fused bias
            ],
            out_specs=pl.BlockSpec((tm_eff, dim_emb), lambda i: (i, 0)),
            scratch_shapes=[pltpu.VMEM((tm_eff, k_act), w2_stack.dtype)],
        ),
        compiler_params=pltpu.CompilerParams(
            dimension_semantics=("parallel",)),   # shard rows across TCs (v7x)
        cost_estimate=cost,
    )(packed, w1_blk, b1_cat, w2_stack, b_out)


# ---------------------------------------------------------------------------
# Host-side parameter fusion (BN folding + block-diagonal / stacked placement)
# ---------------------------------------------------------------------------
def _bn_affine(stats):
    """Eval-mode BatchNorm as affine y = x*scale + shift.  stats is
    (gamma, beta, mean, var[, eps]); eps defaults to PyTorch's 1e-5."""
    if len(stats) == 5:
        gamma, beta, mean, var, eps = stats
    else:
        gamma, beta, mean, var = stats
        eps = 1e-5
    scale = gamma / jnp.sqrt(var + eps)
    shift = beta - mean * scale
    return scale, shift


def fuse_params(params, dim_emb, *, param_dtype=jnp.bfloat16):
    """Fold eval-mode BatchNorms into the first Linears, build the
    block-diagonal layer-1 weight over the packed [x|cw|cs] input and the
    stacked layer-2 weight over the [x|relu_w|relu_s] activation whose
    disjoint column blocks realise the final concat."""
    f32 = jnp.float32
    wx, bx = params["wx"].astype(f32), params["bx"].astype(f32)
    w1w, b1w = params["w1w"].astype(f32), params["b1w"].astype(f32)
    w2w, b2w = params["w2w"].astype(f32), params["b2w"].astype(f32)
    w1s, b1s = params["w1s"].astype(f32), params["b1s"].astype(f32)
    w2s, b2s = params["w2s"].astype(f32), params["b2s"].astype(f32)

    # raw_norm_* (BN on the raw counts) folds into W1 along the INPUT axis.
    if params.get("raw_bn_w") is not None:
        s, t = _bn_affine(params["raw_bn_w"])
        w1w, b1w = s[:, None] * w1w, b1w + t @ w1w
    if params.get("raw_bn_s") is not None:
        s, t = _bn_affine(params["raw_bn_s"])
        w1s, b1s = s[:, None] * w1s, b1s + t @ w1s
    # MLP-internal BN (after the first Linear) folds along the OUTPUT axis.
    if params.get("mlp_bn_w") is not None:
        a, d = _bn_affine(params["mlp_bn_w"])
        w1w, b1w = w1w * a[None, :], b1w * a + d
    if params.get("mlp_bn_s") is not None:
        a, d = _bn_affine(params["mlp_bn_s"])
        w1s, b1s = w1s * a[None, :], b1s * a + d

    dim_in, dim_x = wx.shape
    dim_ogct_w, dim_hid_w = w1w.shape
    dim_ogct_s, dim_hid_s = w1s.shape
    dim_ct_w, dim_ct_s = w2w.shape[1], w2s.shape[1]
    assert w2w.shape[0] == dim_hid_w and w2s.shape[0] == dim_hid_s
    assert dim_x + dim_ct_w + dim_ct_s == dim_emb

    k_in = dim_in + dim_ogct_w + dim_ogct_s
    k_in_pad = _round_up(k_in, 128)          # matches pack_inputs lane padding
    dim_hid = dim_hid_w + dim_hid_s
    k_act = dim_in + dim_hid

    # Layer 1: block-diagonal over the packed input (x rows and pad rows = 0).
    w1_blk = jnp.zeros((k_in_pad, dim_hid), f32)
    w1_blk = w1_blk.at[dim_in:dim_in + dim_ogct_w, :dim_hid_w].set(w1w)
    w1_blk = w1_blk.at[dim_in + dim_ogct_w:k_in, dim_hid_w:].set(w1s)
    b1_cat = jnp.concatenate([b1w, b1s]).astype(f32).reshape(1, dim_hid)

    # Layer 2: vertically stacked [wx ; w2_w ; w2_s] with disjoint column
    # blocks -> one matmul produces the concatenated (N, dim_emb) output.
    w2_stack = jnp.zeros((k_act, dim_emb), f32)
    w2_stack = w2_stack.at[:dim_in, :dim_x].set(wx)
    w2_stack = w2_stack.at[dim_in:dim_in + dim_hid_w,
                           dim_x:dim_x + dim_ct_w].set(w2w)
    w2_stack = w2_stack.at[dim_in + dim_hid_w:, dim_x + dim_ct_w:].set(w2s)
    b_out = jnp.concatenate([bx, b2w, b2s]).astype(f32).reshape(1, dim_emb)

    # TODO(synk): expand_x=False passthrough (direct column copy of x into the
    # output instead of the wx block) is not implemented in this kernel variant.
    return (w1_blk.astype(param_dtype), b1_cat,
            w2_stack.astype(param_dtype), b_out)


# ---------------------------------------------------------------------------
# Pure-JAX references (for validation)
# ---------------------------------------------------------------------------
def reference_forward(x, counts_wl, counts_spasm, params):
    """Unfused f32 mirror of the PyTorch eval-mode forward."""
    def bn(v, stats):
        if stats is None:
            return v
        if len(stats) == 5:
            gamma, beta, mean, var, eps = stats
        else:
            gamma, beta, mean, var = stats
            eps = 1e-5
        return (v - mean) / jnp.sqrt(var + eps) * gamma + beta

    cw = bn(counts_wl, params.get("raw_bn_w"))
    zw = bn(cw @ params["w1w"] + params["b1w"], params.get("mlp_bn_w"))
    ew = jnp.maximum(zw, 0.0) @ params["w2w"] + params["b2w"]

    cs = bn(counts_spasm, params.get("raw_bn_s"))
    zs = bn(cs @ params["w1s"] + params["b1s"], params.get("mlp_bn_s"))
    es = jnp.maximum(zs, 0.0) @ params["w2s"] + params["b2s"]

    h = x @ params["wx"] + params["bx"]
    return jnp.concatenate([h, ew, es], axis=1)


def fused_forward_reference(packed, fused_params):
    """Pure-JAX emulation of the fused kernel math (same packed input and
    fused params, f32 accumulation)."""
    w1_blk, b1_cat, w2_stack, b_out = fused_params
    f32 = jnp.float32
    dim_hid = w1_blk.shape[1]
    dim_in = w2_stack.shape[0] - dim_hid
    p = packed.astype(f32)
    z = jnp.maximum(p @ w1_blk.astype(f32) + b1_cat, 0.0)
    act = jnp.concatenate(
        [p[:, :dim_in], z.astype(packed.dtype).astype(f32)], axis=1)
    return act @ w2_stack.astype(f32) + b_out


# ---------------------------------------------------------------------------
if __name__ == "__main__":
    # Small shapes consistent with the module:
    #   dim_in=64 raw node feats, dim_emb=128,
    #   dim_ct = dim_ct_w + dim_ct_s = 32 + 32 = 64, expand_x -> linear_x 64->64.
    N = 300                                   # intentionally not a tile multiple
    dim_in = 64
    dim_emb = 128
    dim_ogct_w, dim_hid_w, dim_ct_w = 24, 32, 32
    dim_ogct_s, dim_hid_s, dim_ct_s = 16, 32, 32
    dim_x = dim_emb - (dim_ct_w + dim_ct_s)

    key = jax.random.PRNGKey(0)
    ks = jax.random.split(key, 16)

    x = jax.random.normal(ks[0], (N, dim_in), jnp.float32)
    counts_wl = jax.random.uniform(ks[1], (N, dim_ogct_w), jnp.float32, 0.0, 4.0)
    counts_spasm = jax.random.uniform(ks[2], (N, dim_ogct_s), jnp.float32, 0.0, 4.0)

    def lin_init(kw, kb, fan_in, fan_out):
        lim = (6.0 / (fan_in + fan_out)) ** 0.5
        w = jax.random.uniform(kw, (fan_in, fan_out), jnp.float32, -lim, lim)
        b = jax.random.uniform(kb, (fan_out,), jnp.float32, -0.1, 0.1)
        return w, b

    def bn_init(k, dim, eps=None):
        kg, kb, km, kv = jax.random.split(k, 4)
        gamma = jax.random.uniform(kg, (dim,), jnp.float32, 0.5, 1.5)
        beta = jax.random.uniform(kb, (dim,), jnp.float32, -0.3, 0.3)
        mean = jax.random.uniform(km, (dim,), jnp.float32, -0.5, 0.5)
        var = jax.random.uniform(kv, (dim,), jnp.float32, 0.5, 2.0)
        return (gamma, beta, mean, var) if eps is None \
            else (gamma, beta, mean, var, eps)

    wx, bx = lin_init(ks[3], ks[4], dim_in, dim_x)           # linear_x (expand_x)
    w1w, b1w = lin_init(ks[5], ks[6], dim_ogct_w, dim_hid_w)
    w2w, b2w = lin_init(ks[7], ks[8], dim_hid_w, dim_ct_w)   # encoder_w
    w1s, b1s = lin_init(ks[9], ks[10], dim_ogct_s, dim_hid_s)
    w2s, b2s = lin_init(ks[11], ks[12], dim_hid_s, dim_ct_s)  # encoder_s

    params = dict(
        wx=wx, bx=bx,
        w1w=w1w, b1w=b1w, w2w=w2w, b2w=b2w,
        w1s=w1s, b1s=b1s, w2s=w2s, b2s=b2s,
        raw_bn_w=bn_init(ks[13], dim_ogct_w, eps=1e-3),  # non-default eps threaded
        raw_bn_s=bn_init(ks[14], dim_ogct_s),            # cfg...spasm.raw_bn = True
        mlp_bn_w=bn_init(ks[15], dim_hid_w),             # PyG MLP norm='batch_norm'
        mlp_bn_s=bn_init(jax.random.fold_in(key, 99), dim_hid_s),
    )

    # 1) Validate the host-side fusion math (BN folding incl. eps, block
    #    layout, concat order) in pure f32 against the unfused reference.
    ref = reference_forward(x, counts_wl, counts_spasm, params)
    fused_f32 = fuse_params(params, dim_emb, param_dtype=jnp.float32)
    packed_f32 = pack_inputs(x, counts_wl, counts_spasm, dtype=jnp.float32)
    fused_ref = fused_forward_reference(packed_f32, fused_f32)
    assert jnp.allclose(fused_ref, ref, atol=2e-3, rtol=2e-3), (
        "fusion mismatch vs unfused reference, max abs err = "
        f"{float(jnp.max(jnp.abs(fused_ref - ref)))}")

    # 2) Run the Pallas kernel on the bf16 streaming path (ragged grid of >= 2
    #    steps) and compare against a pure-JAX emulation of the same fused math.
    fused = fuse_params(params, dim_emb)                     # bf16 weights
    packed = pack_inputs(x, counts_wl, counts_spasm)         # bf16 rows, 128 lanes
    out = mlp_node_count_encoder_x2(packed, fused, tm=2048, min_steps=2)
    out = jax.block_until_ready(out)
    assert out.shape == (N, dim_emb)
    assert out.dtype == jnp.bfloat16

    emul = fused_forward_reference(packed, fused)
    max_err = float(jnp.max(jnp.abs(out.astype(jnp.float32) - emul)))
    assert jnp.allclose(out.astype(jnp.float32), emul, atol=2e-2, rtol=2e-2), (
        f"kernel mismatch vs fused bf16 emulation, max abs err = {max_err}")

    print("KERNEL_OK")
</pallas_src>

<mosaic_0001>
module attributes {stable_mosaic.version = 11 : i64} {
  func.func @_count_enc_x2_kernel(%arg0: i32, %arg1: memref<152x128xbf16, #tpu.memory_space<vmem>>, %arg2: memref<128x64xbf16, #tpu.memory_space<vmem>>, %arg3: memref<1x64xf32, #tpu.memory_space<vmem>>, %arg4: memref<128x128xbf16, #tpu.memory_space<vmem>>, %arg5: memref<1x128xf32, #tpu.memory_space<vmem>>, %arg6: memref<152x128xbf16, #tpu.memory_space<vmem>>, %arg7: memref<152x128xbf16, #tpu.memory_space<vmem>>) attributes {dimension_semantics = [#tpu.dimension_semantics<parallel>], iteration_bounds = array<i64: 2>, scalar_prefetch = 0 : i64, scratch_operands = 1 : i64, tpu.core_type = #tpu.core_type<tc>, window_params = [{transform_indices = @transform_0, window_bounds = array<i64: 152, 128>}, {pipeline_mode = #tpu.pipeline_mode<synchronous>, transform_indices = @transform_1, window_bounds = array<i64: 128, 64>}, {pipeline_mode = #tpu.pipeline_mode<synchronous>, transform_indices = @transform_2, window_bounds = array<i64: 1, 64>}, {pipeline_mode = #tpu.pipeline_mode<synchronous>, transform_indices = @transform_3, window_bounds = array<i64: 128, 128>}, {pipeline_mode = #tpu.pipeline_mode<synchronous>, transform_indices = @transform_4, window_bounds = array<i64: 1, 128>}, {transform_indices = @transform_5, window_bounds = array<i64: 152, 128>}]} {
    %c0 = arith.constant 0 : index
    %c0_0 = arith.constant 0 : index
    %0 = vector.load %arg1[%c0, %c0_0] : memref<152x128xbf16, #tpu.memory_space<vmem>>, vector<152x128xbf16>
    %c0_1 = arith.constant 0 : index
    %c0_2 = arith.constant 0 : index
    %1 = vector.load %arg2[%c0_1, %c0_2] : memref<128x64xbf16, #tpu.memory_space<vmem>>, vector<128x64xbf16>
    %cst = arith.constant dense<0.000000e+00> : vector<152x64xf32>
    %2 = tpu.matmul %0, %1, %cst {dimension_numbers = #tpu.dot_dimension_numbers<[1], [0], [0], [1], [0, 0, 1, 1], [], []>} : vector<152x128xbf16>, vector<128x64xbf16>, vector<152x64xf32> -> vector<152x64xf32>
    %c0_3 = arith.constant 0 : index
    %c0_4 = arith.constant 0 : index
    %3 = vector.load %arg3[%c0_3, %c0_4] : memref<1x64xf32, #tpu.memory_space<vmem>>, vector<1x64xf32>
    %4 = vector.broadcast %3 : vector<1x64xf32> to vector<152x64xf32>
    %5 = arith.addf %2, %4 : vector<152x64xf32>
    %cst_5 = arith.constant 0.000000e+00 : f32
    %6 = vector.broadcast %cst_5 : f32 to vector<152x64xf32>
    %7 = arith.maximumf %5, %6 : vector<152x64xf32>
    %8 = vector.extract_strided_slice %0 {offsets = [0, 0], sizes = [152, 64], strides = [1, 1]} : vector<152x128xbf16> to vector<152x64xbf16>
    %c0_6 = arith.constant 0 : index
    %c0_7 = arith.constant 0 : index
    %9 = vector.load %arg7[%c0_6, %c0_7] : memref<152x128xbf16, #tpu.memory_space<vmem>>, vector<152x64xbf16>
    tpu.vector_store %arg7[%c0_6, %c0_7], %8 {strides = array<i32>} : memref<152x128xbf16, #tpu.memory_space<vmem>>, vector<152x64xbf16>,
    %10 = arith.truncf %7 : vector<152x64xf32> to vector<152x64xbf16>
    %c0_8 = arith.constant 0 : index
    %c64 = arith.constant 64 : index
    %11 = vector.load %arg7[%c0_8, %c64] : memref<152x128xbf16, #tpu.memory_space<vmem>>, vector<152x64xbf16>
    tpu.vector_store %arg7[%c0_8, %c64], %10 {strides = array<i32>} : memref<152x128xbf16, #tpu.memory_space<vmem>>, vector<152x64xbf16>,
    %c0_9 = arith.constant 0 : index
    %c0_10 = arith.constant 0 : index
    %12 = vector.load %arg7[%c0_9, %c0_10] : memref<152x128xbf16, #tpu.memory_space<vmem>>, vector<152x128xbf16>
    %c0_11 = arith.constant 0 : index
    %c0_12 = arith.constant 0 : index
    %13 = vector.load %arg4[%c0_11, %c0_12] : memref<128x128xbf16, #tpu.memory_space<vmem>>, vector<128x128xbf16>
    %cst_13 = arith.constant dense<0.000000e+00> : vector<152x128xf32>
    %14 = tpu.matmul %12, %13, %cst_13 {dimension_numbers = #tpu.dot_dimension_numbers<[1], [0], [0], [1], [0, 0, 1, 1], [], []>} : vector<152x128xbf16>, vector<128x128xbf16>, vector<152x128xf32> -> vector<152x128xf32>
    %c0_14 = arith.constant 0 : index
    %c0_15 = arith.constant 0 : index
    %15 = vector.load %arg5[%c0_14, %c0_15] : memref<1x128xf32, #tpu.memory_space<vmem>>, vector<1x128xf32>
    %16 = vector.broadcast %15 : vector<1x128xf32> to vector<152x128xf32>
    %17 = arith.addf %14, %16 : vector<152x128xf32>
    %18 = arith.truncf %17 : vector<152x128xf32> to vector<152x128xbf16>
    %c0_16 = arith.constant 0 : index
    %c0_17 = arith.constant 0 : index
    %19 = vector.load %arg6[%c0_16, %c0_17] : memref<152x128xbf16, #tpu.memory_space<vmem>>, vector<152x128xbf16>
    tpu.vector_store %arg6[%c0_16, %c0_17], %18 {strides = array<i32>} : memref<152x128xbf16, #tpu.memory_space<vmem>>, vector<152x128xbf16>,
    return
  }
  func.func @transform_0(%arg0: i32) -> (i32, i32) {
    %c0_i32 = arith.constant 0 : i32
    %c0_i32_0 = arith.constant 0 : i32
    return %arg0, %c0_i32 : i32, i32
  }
  func.func @transform_1(%arg0: i32) -> (i32, i32) {
    %c0_i32 = arith.constant 0 : i32
    %c0_i32_0 = arith.constant 0 : i32
    %c0_i32_1 = arith.constant 0 : i32
    return %c0_i32, %c0_i32_0 : i32, i32
  }
  func.func @transform_2(%arg0: i32) -> (i32, i32) {
    %c0_i32 = arith.constant 0 : i32
    %c0_i32_0 = arith.constant 0 : i32
    %c0_i32_1 = arith.constant 0 : i32
    return %c0_i32, %c0_i32_0 : i32, i32
  }
  func.func @transform_3(%arg0: i32) -> (i32, i32) {
    %c0_i32 = arith.constant 0 : i32
    %c0_i32_0 = arith.constant 0 : i32
    %c0_i32_1 = arith.constant 0 : i32
    return %c0_i32, %c0_i32_0 : i32, i32
  }
  func.func @transform_4(%arg0: i32) -> (i32, i32) {
    %c0_i32 = arith.constant 0 : i32
    %c0_i32_0 = arith.constant 0 : i32
    %c0_i32_1 = arith.constant 0 : i32
    return %c0_i32, %c0_i32_0 : i32, i32
  }
  func.func @transform_5(%arg0: i32) -> (i32, i32) {
    %c0_i32 = arith.constant 0 : i32
    %c0_i32_0 = arith.constant 0 : i32
    return %arg0, %c0_i32 : i32, i32
  }
}

</mosaic_0001>

<llo_original>
// kernel: tpu_custom_call.1
$region0: #{tpu_custom_call.1}
  #allocation0 [shape = 'u32[]', space=smem, size = 0x4, offset = 0x4, fixed_abs, tag = 'smem constant byte address 0x4 - core index']
  #allocation1 [shape = 'u32[72,128]{1,0:T(1,128)}', space=vmem, size = 0x9000, scoped, tag = 'internal scratch']
  #allocation2 [shape = 'bf16[152,128]{1,0:T(8,128)(2,1)}', space=vmem, size = 0x9800, scoped, tag = 'scratch operand']
  %s0 = inlined_call_operand.hbm [shape: bf16[300,128], index: 0, kind: input, shape index: {}]
  %s1 = inlined_call_operand.vmem [shape: bf16[128,64], index: 1, kind: input, shape index: {}]
  %s2 = inlined_call_operand.vmem [shape: f32[1,64], index: 2, kind: input, shape index: {}]
  %s3 = inlined_call_operand.vmem [shape: bf16[128,128], index: 3, kind: input, shape index: {}]
  %s4 = inlined_call_operand.vmem [shape: f32[1,128], index: 4, kind: input, shape index: {}]
  %s5 = inlined_call_operand.hbm [shape: bf16[300,128], index: 5, kind: output, shape index: {}]
  %s6 = sld [smem:[#allocation0]]
  $region57: #{tpu_custom_call.1} parent=0
    _
  %s8 = ssub.s32 1, %s6
  %s9 = scalar_select 0, %s8, %s6
  $region1: #{tpu_custom_call.1} parent=0
    #allocation3 [shape = 'u8[77824]{0}', space=vmem, size = 0x13000, scoped, tag = 'input window, operand 0']
    #allocation4 [shape = 's32[2]{0}', space=sflag, size = 0x8, scoped, tag = 'scoped memory for tpu_custom_call.1']
    #allocation5 [shape = 's32[2]{0}', space=sflag, size = 0x8, scoped, tag = 'scoped memory for tpu_custom_call.1']
    #allocation6 [shape = 'u8[77824]{0}', space=vmem, size = 0x13000, scoped, tag = 'output window, operand 0']
    %10 = vsyncpa [#allocation4], 0
    %s11 = scalar_lea.sflag [#allocation4], 1
    %12 = vsyncpa %s11, 0
    %13 = vsyncpa [#allocation5], 0
    %s14 = scalar_lea.sflag [#allocation5], 1
    %15 = vsyncpa %s14, 0
    loop: start=0, step=1, limit=4
    $region2: #{tpu_custom_call.1} parent=1 // loop_pre_header
      _
    $region3: #{tpu_custom_call.1} parent=1 // loop_header
      %s17 = sphi 0, %s21
      %p18 = scmp.ge.s32.totalorder %s17, 4
      %s27 = sphi 0, %s29
      %s30 = sphi 0, %s27
      %s31 = sphi 0, %s30
      %s47 = sphi 0, %s31
      %s51 = sphi 0, %s51
      %s53 = sphi 0, %s51
      %s54 = sphi 0, %s53
      %s68 = sphi 0, %s54
      %s72 = sphi 0, %s72
      %s74 = sphi 0, %s72
      %s75 = sphi 0, %s74
      %s89 = sphi 0, %s75
      %s93 = sphi 0, %s93
      %s95 = sphi 0, %s93
      %s96 = sphi 0, %s95
      %s110 = sphi 0, %s96
      %s114 = sphi 0, %s114
      %s116 = sphi 0, %s114
      %s117 = sphi 0, %s116
      %s131 = sphi 0, %s117
      %s137 = sphi 0, %s139
      %s140 = sphi 0, %s137
      %s141 = sphi 0, %s140
      %s157 = sphi 0, %s141
    $region4: #{tpu_custom_call.1} parent=1 // loop_header_branch
      %20 = sbr.rel (%p18) target = $region8
    $region5: #{tpu_custom_call.1} parent=1 // loop_body
      %s22 = ssub.s32 %s17, 1
      %s23 = ssub.s32 %s17, 2
      %s24 = sadd.s32 %s17, 1
      %s25 = ssub.s32 %s17, %s24
      %p26 = scmp.eq.s32.totalorder %s25, 0
      %s28 = sadd.s32 %s27, 1
      %s29 = scalar_select %p26, %s27, %s28
      %p32 = pneg %p26
      %p33 = scmp.eq.s32.totalorder %s17, 1
      %p34 = por %p32, %p33
      %p35 = scmp.ne.s32.totalorder %s27, %s30
      %p36 = scmp.eq.s32.totalorder %s17, 0
      %p37 = por %p35, %p36
      %p38 = scmp.ne.s32.totalorder %s27, %s30
      %p39 = scmp.eq.s32.totalorder %s22, 1
      %p40 = por %p38, %p39
      %p41 = scmp.ne.s32.totalorder %s30, %s31
      %p42 = scmp.eq.s32.totalorder %s22, 0
      %p43 = por %p41, %p42
      %p44 = scmp.ne.s32.totalorder %s30, %s31
      %p45 = scmp.eq.s32.totalorder %s23, 1
      %p46 = por %p44, %p45
      %p48 = scmp.ne.s32.totalorder %s31, %s47
      %p49 = scmp.eq.s32.totalorder %s23, 0
      %p50 = por %p48, %p49
      %s52 = sadd.s32 %s51, 1
      %p55 = scmp.eq.s32.totalorder %s17, 1
      %p56 = scmp.ne.s32.totalorder %s51, %s53
      %p57 = scmp.eq.s32.totalorder %s17, 0
      %p58 = por %p56, %p57
      %p59 = scmp.ne.s32.totalorder %s51, %s53
      %p60 = scmp.eq.s32.totalorder %s22, 1
      %p61 = por %p59, %p60
      %p62 = scmp.ne.s32.totalorder %s53, %s54
      %p63 = scmp.eq.s32.totalorder %s22, 0
      %p64 = por %p62, %p63
      %p65 = scmp.ne.s32.totalorder %s53, %s54
      %p66 = scmp.eq.s32.totalorder %s23, 1
      %p67 = por %p65, %p66
      %p69 = scmp.ne.s32.totalorder %s54, %s68
      %p70 = scmp.eq.s32.totalorder %s23, 0
      %p71 = por %p69, %p70
      %s73 = sadd.s32 %s72, 1
      %p76 = scmp.eq.s32.totalorder %s17, 1
      %p77 = scmp.ne.s32.totalorder %s72, %s74
      %p78 = scmp.eq.s32.totalorder %s17, 0
      %p79 = por %p77, %p78
      %p80 = scmp.ne.s32.totalorder %s72, %s74
      %p81 = scmp.eq.s32.totalorder %s22, 1
      %p82 = por %p80, %p81
      %p83 = scmp.ne.s32.totalorder %s74, %s75
      %p84 = scmp.eq.s32.totalorder %s22, 0
      %p85 = por %p83, %p84
      %p86 = scmp.ne.s32.totalorder %s74, %s75
      %p87 = scmp.eq.s32.totalorder %s23, 1
      %p88 = por %p86, %p87
      %p90 = scmp.ne.s32.totalorder %s75, %s89
      %p91 = scmp.eq.s32.totalorder %s23, 0
      %p92 = por %p90, %p91
      %s94 = sadd.s32 %s93, 1
      %p97 = scmp.eq.s32.totalorder %s17, 1
      %p98 = scmp.ne.s32.totalorder %s93, %s95
      %p99 = scmp.eq.s32.totalorder %s17, 0
      %p100 = por %p98, %p99
      %p101 = scmp.ne.s32.totalorder %s93, %s95
      %p102 = scmp.eq.s32.totalorder %s22, 1
      %p103 = por %p101, %p102
      %p104 = scmp.ne.s32.totalorder %s95, %s96
      %p105 = scmp.eq.s32.totalorder %s22, 0
      %p106 = por %p104, %p105
      %p107 = scmp.ne.s32.totalorder %s95, %s96
      %p108 = scmp.eq.s32.totalorder %s23, 1
      %p109 = por %p107, %p108
      %p111 = scmp.ne.s32.totalorder %s96, %s110
      %p112 = scmp.eq.s32.totalorder %s23, 0
      %p113 = por %p111, %p112
      %s115 = sadd.s32 %s114, 1
      %p118 = scmp.eq.s32.totalorder %s17, 1
      %p119 = scmp.ne.s32.totalorder %s114, %s116
      %p120 = scmp.eq.s32.totalorder %s17, 0
      %p121 = por %p119, %p120
      %p122 = scmp.ne.s32.totalorder %s114, %s116
      %p123 = scmp.eq.s32.totalorder %s22, 1
      %p124 = por %p122, %p123
      %p125 = scmp.ne.s32.totalorder %s116, %s117
      %p126 = scmp.eq.s32.totalorder %s22, 0
      %p127 = por %p125, %p126
      %p128 = scmp.ne.s32.totalorder %s116, %s117
      %p129 = scmp.eq.s32.totalorder %s23, 1
      %p130 = por %p128, %p129
      %p132 = scmp.ne.s32.totalorder %s117, %s131
      %p133 = scmp.eq.s32.totalorder %s23, 0
      %p134 = por %p132, %p133
      %s135 = ssub.s32 %s17, %s24
      %p136 = scmp.eq.s32.totalorder %s135, 0
      %s138 = sadd.s32 %s137, 1
      %s139 = scalar_select %p136, %s137, %s138
      %p142 = pneg %p136
      %p143 = scmp.eq.s32.totalorder %s17, 1
      %p144 = por %p142, %p143
      %p145 = scmp.ne.s32.totalorder %s137, %s140
      %p146 = scmp.eq.s32.totalorder %s17, 0
      %p147 = por %p145, %p146
      %p148 = scmp.ne.s32.totalorder %s137, %s140
      %p149 = scmp.eq.s32.totalorder %s22, 1
      %p150 = por %p148, %p149
      %p151 = scmp.ne.s32.totalorder %s140, %s141
      %p152 = scmp.eq.s32.totalorder %s22, 0
      %p153 = por %p151, %p152
      %p154 = scmp.ne.s32.totalorder %s140, %s141
      %p155 = scmp.eq.s32.totalorder %s23, 1
      %p156 = por %p154, %p155
      %p158 = scmp.ne.s32.totalorder %s141, %s157
      %p159 = scmp.eq.s32.totalorder %s23, 0
      %p160 = por %p158, %p159
      %p161 = scmp.le.s32.totalorder 1, %s17
      %p162 = scmp.lt.s32.totalorder %s17, 3
      %p163 = pnand %p161, %p162
      %p164 = pneg %p163
      // Predicated region
      $region9: #{tpu_custom_call.1} parent=5 // pred_check
        _
      $region10: #{tpu_custom_call.1} parent=5 // pred_check_branch
        %166 = sbr.rel (%p163) target = $region12
      $region11: #{tpu_custom_call.1} parent=5 // pred_region
        %s167 = ssub.s32 %s17, 1
        // Predicated region
        $region13: #{tpu_custom_call.1} parent=11 // pred_check
          %p168 = pneg %p64
        $region14: #{tpu_custom_call.1} parent=11 // pred_check_branch
          %170 = sbr.rel (%p168) target = $region16
        $region15: #{tpu_custom_call.1} parent=11 // pred_region
          _
        $region16: #{tpu_custom_call.1} parent=11 // pred_fallthru
          _
        // Predicated region
        $region17: #{tpu_custom_call.1} parent=11 // pred_check
          %p171 = pneg %p85
        $region18: #{tpu_custom_call.1} parent=11 // pred_check_branch
          %173 = sbr.rel (%p171) target = $region20
        $region19: #{tpu_custom_call.1} parent=11 // pred_region
          _
        $region20: #{tpu_custom_call.1} parent=11 // pred_fallthru
          _
        // Predicated region
        $region21: #{tpu_custom_call.1} parent=11 // pred_check
          %p174 = pneg %p106
        $region22: #{tpu_custom_call.1} parent=11 // pred_check_branch
          %176 = sbr.rel (%p174) target = $region24
        $region23: #{tpu_custom_call.1} parent=11 // pred_region
          _
        $region24: #{tpu_custom_call.1} parent=11 // pred_fallthru
          _
        // Predicated region
        $region25: #{tpu_custom_call.1} parent=11 // pred_check
          %p177 = pneg %p127
        $region26: #{tpu_custom_call.1} parent=11 // pred_check_branch
          %179 = sbr.rel (%p177) target = $region28
        $region27: #{tpu_custom_call.1} parent=11 // pred_region
          _
        $region28: #{tpu_custom_call.1} parent=11 // pred_fallthru
          _
      $region12: #{tpu_custom_call.1} parent=5 // pred_fallthru
        _
      %p180 = scmp.lt.s32.totalorder %s17, 2
      // Predicated region
      $region29: #{tpu_custom_call.1} parent=5 // pred_check
        %p181 = pneg %p180
      $region30: #{tpu_custom_call.1} parent=5 // pred_check_branch
        %183 = sbr.rel (%p181) target = $region32
      $region31: #{tpu_custom_call.1} parent=5 // pred_region
        // Predicated region
        $region33: #{tpu_custom_call.1} parent=31 // pred_check
          %p184 = pneg %p37
        $region34: #{tpu_custom_call.1} parent=31 // pred_check_branch
          %186 = sbr.rel (%p184) target = $region36
        $region35: #{tpu_custom_call.1} parent=31 // pred_region
          %s187 = sand.u32 %s27, 1
          %s188 = scalar_lea.sflag [#allocation4], %s187
          %s189 = sand.u32 %s27, 1
          %s190 = smul.addr %s189, 76
          %s191 = scalar_lea.vmem [#allocation3], %s190
          %s192 = smul.u32 19, %s17
          %194 = vsyncadd %s188, 0
          %s195 = smul.addr %s192, 4
          %s196 = scalar_lea.hbm %s0, %s195
          %s197 = sshll.u32 %s196, 4
          %s198 = int_to_ptr.hbm [resolvable:$true] %s197
          %s199 = sshll.u32 %s191, 4
          %s200 = int_to_ptr.vmem [resolvable:$true] %s199
          %205 = dma.hbm_to_vmem [thread:$0]  %s198, 1216, %s200, %s188, 64, 64, 4
        $region36: #{tpu_custom_call.1} parent=31 // pred_fallthru
          _
      $region32: #{tpu_custom_call.1} parent=5 // pred_fallthru
        _
      %p206 = scmp.le.s32.totalorder 1, %s17
      %p207 = scmp.lt.s32.totalorder %s17, 3
      %p208 = pnand %p206, %p207
      %p209 = pneg %p208
      // Predicated region
      $region37: #{tpu_custom_call.1} parent=5 // pred_check
        _
      $region38: #{tpu_custom_call.1} parent=5 // pred_check_branch
        %211 = sbr.rel (%p208) target = $region40
      $region39: #{tpu_custom_call.1} parent=5 // pred_region
        %s212 = ssub.s32 %s17, 1
        %s213 = sand.u32 %s30, 1
        %s214 = scalar_lea.sflag [#allocation4], %s213
        %s215 = sand.u32 %s30, 1
        %s216 = smul.addr %s215, 76
        %s217 = scalar_lea.vmem [#allocation3], %s216
        // Predicated region
        $region41: #{tpu_custom_call.1} parent=39 // pred_check
          %p218 = pneg %p43
        $region42: #{tpu_custom_call.1} parent=39 // pred_check_branch
          %220 = sbr.rel (%p218) target = $region44
        $region43: #{tpu_custom_call.1} parent=39 // pred_region
          %222 = dma.done %s214, 1216
        $region44: #{tpu_custom_call.1} parent=39 // pred_fallthru
          _
        %s223 = sand.u32 %s30, 1
        %s224 = scalar_lea.sflag [#allocation4], %s223
        %s225 = sand.u32 %s30, 1
        %s226 = smul.addr %s225, 76
        %s227 = scalar_lea.vmem [#allocation3], %s226
        %p228 = pneg %p43
        %p229 = pneg %p40
        %p230 = pneg %p64
        %p231 = pneg %p61
        %p232 = pneg %p85
        %p233 = pneg %p82
        %p234 = pneg %p106
        %p235 = pneg %p103
        %p236 = pneg %p127
        %p237 = pneg %p124
        %p238 = pneg %p153
        %p239 = pneg %p150
        %s240 = sand.u32 %s140, 1
        %s241 = scalar_lea.sflag [#allocation5], %s240
        %s242 = sand.u32 %s140, 1
        %s243 = smul.addr %s242, 76
        %s244 = scalar_lea.vmem [#allocation6], %s243
        %s245 = smul.u32 19, %s22
        %s246 = smul.u32 19, %s22
        %v247 = vld [vmem:[%s217] sm:$0xf]
        %v248 = vld [vmem:[%s217 + $0x4] sm:$0xf]
        %v249 = vld [vmem:[%s217 + $0x8] sm:$0xf]
        %v250 = vld [vmem:[%s217 + $0xc] sm:$0xf]
        %v251 = vld [vmem:[%s217 + $0x10] sm:$0xf]
        %v252 = vld [vmem:[%s217 + $0x14] sm:$0xf]
        %v253 = vld [vmem:[%s217 + $0x18] sm:$0xf]
        %v254 = vld [vmem:[%s217 + $0x1c] sm:$0xf]
        %v255 = vld [vmem:[%s217 + $0x20] sm:$0xf]
        %v256 = vld [vmem:[%s217 + $0x24] sm:$0xf]
        %v257 = vld [vmem:[%s217 + $0x28] sm:$0xf]
        %v258 = vld [vmem:[%s217 + $0x2c] sm:$0xf]
        %v259 = vld [vmem:[%s217 + $0x30] sm:$0xf]
        %v260 = vld [vmem:[%s217 + $0x34] sm:$0xf]
        %v261 = vld [vmem:[%s217 + $0x38] sm:$0xf]
        %v262 = vld [vmem:[%s217 + $0x3c] sm:$0xf]
        %v263 = vld [vmem:[%s217 + $0x40] sm:$0xf]
        %v264 = vld [vmem:[%s217 + $0x44] sm:$0xf]
        %v265 = vld [vmem:[%s217 + $0x48] sm:$0xf]
        %v266 = vld [vmem:[%s1] sm:$0xf]
        %v267 = vld [vmem:[%s1 + $0x4] sm:$0xf]
        %v268 = vld [vmem:[%s1 + $0x8] sm:$0xf]
        %v269 = vld [vmem:[%s1 + $0xc] sm:$0xf]
        %v270 = vld [vmem:[%s1 + $0x10] sm:$0xf]
        %v271 = vld [vmem:[%s1 + $0x14] sm:$0xf]
        %v272 = vld [vmem:[%s1 + $0x18] sm:$0xf]
        %v273 = vld [vmem:[%s1 + $0x1c] sm:$0xf]
        %v274 = vld [vmem:[%s1 + $0x20] sm:$0xf]
        %v275 = vld [vmem:[%s1 + $0x24] sm:$0xf]
        %v276 = vld [vmem:[%s1 + $0x28] sm:$0xf]
        %v277 = vld [vmem:[%s1 + $0x2c] sm:$0xf]
        %v278 = vld [vmem:[%s1 + $0x30] sm:$0xf]
        %v279 = vld [vmem:[%s1 + $0x34] sm:$0xf]
        %v280 = vld [vmem:[%s1 + $0x38] sm:$0xf]
        %v281 = vld [vmem:[%s1 + $0x3c] sm:$0xf]
        %v282 = vld [vmem:[%s2] sm:$0x1]
        %v284 = vperm.slane %v282, 0
        %v305 = vunpack.c.l.b16 %v247
        %v306 = vunpack.c.l.b16 %v248
        %v307 = vunpack.c.l.b16 %v249
        %v308 = vunpack.c.l.b16 %v250
        %v309 = vunpack.c.l.b16 %v251
        %v310 = vunpack.c.l.b16 %v252
        %v311 = vunpack.c.l.b16 %v253
        %v312 = vunpack.c.l.b16 %v254
        %v313 = vunpack.c.l.b16 %v255
        %v314 = vunpack.c.l.b16 %v256
        %v315 = vunpack.c.l.b16 %v257
        %v316 = vunpack.c.l.b16 %v258
        %v317 = vunpack.c.l.b16 %v259
        %v318 = vunpack.c.l.b16 %v260
        %v319 = vunpack.c.l.b16 %v261
        %v320 = vunpack.c.l.b16 %v262
        %v321 = vunpack.c.l.b16 %v263
        %v322 = vunpack.c.l.b16 %v264
        %v323 = vunpack.c.l.b16 %v265
        %v324 = vpack.c.b16 %v306, %v305
        %v325 = vpack.c.b16 %v308, %v307
        %v326 = vpack.c.b16 %v310, %v309
        %v327 = vpack.c.b16 %v312, %v311
        %v328 = vpack.c.b16 %v314, %v313
        %v329 = vpack.c.b16 %v316, %v315
        %v330 = vpack.c.b16 %v318, %v317
        %v331 = vpack.c.b16 %v320, %v319
        %v332 = vpack.c.b16 %v322, %v321
        %v333 = vpack.c.b16 %v323, %v323
        %v360 = vunpack.c.l.b16 %v266
        %v361 = vunpack.c.l.b16 %v267
        %v362 = vunpack.c.l.b16 %v268
        %v363 = vunpack.c.l.b16 %v269
        %v364 = vunpack.c.l.b16 %v270
        %v365 = vunpack.c.l.b16 %v271
        %v366 = vunpack.c.l.b16 %v272
        %v367 = vunpack.c.l.b16 %v273
        %v368 = vunpack.c.l.b16 %v274
        %v369 = vunpack.c.l.b16 %v275
        %v370 = vunpack.c.l.b16 %v276
        %v371 = vunpack.c.l.b16 %v277
        %v372 = vunpack.c.l.b16 %v278
        %v373 = vunpack.c.l.b16 %v279
        %v374 = vunpack.c.l.b16 %v280
        %v375 = vunpack.c.l.b16 %v281
        %v376 = vpack.c.b16 %v361, %v360
        %v377 = vpack.c.b16 %v363, %v362
        %v378 = vpack.c.b16 %v365, %v364
        %v379 = vpack.c.b16 %v367, %v366
        %v380 = vpack.c.b16 %v369, %v368
        %v381 = vpack.c.b16 %v371, %v370
        %v382 = vpack.c.b16 %v373, %v372
        %v383 = vpack.c.b16 %v375, %v374
        %392 = vmatpush.bf16.msra.mxu0 %v383
        %393 = vmatpush.bf16.msra.mxu0 %v382
        %394 = vmatpush.bf16.msra.mxu0 %v381
        %395 = vmatpush.bf16.msra.mxu0 %v380
        %396 = vmatpush.bf16.msra.mxu0 %v379
        %397 = vmatpush.bf16.msra.mxu0 %v378
        %398 = vmatpush.bf16.msra.mxu0 %v377
        %399 = vmatpush.bf16.msra.mxu0 %v376
        %400 = vmatmul.bf16.gmra.mxu0 %v324
        %v401 = vpop.f32.mrf.mxu0
        %v402 = vadd.f32 %v284, %v401
        %v403 = vpop.f32.mrf.mxu0
        %v404 = vadd.f32 %v284, %v403
        %405 = vmatmul.bf16.gmra.mxu0 %v325
        %v406 = vpop.f32.mrf.mxu0
        %v407 = vadd.f32 %v284, %v406
        %v408 = vpop.f32.mrf.mxu0
        %v409 = vadd.f32 %v284, %v408
        %410 = vmatmul.bf16.gmra.mxu0 %v326
        %v411 = vpop.f32.mrf.mxu0
        %v412 = vadd.f32 %v284, %v411
        %v413 = vpop.f32.mrf.mxu0
        %v414 = vadd.f32 %v284, %v413
        %415 = vmatmul.bf16.gmra.mxu0 %v327
        %v416 = vpop.f32.mrf.mxu0
        %v417 = vadd.f32 %v284, %v416
        %v418 = vpop.f32.mrf.mxu0
        %v419 = vadd.f32 %v284, %v418
        %420 = vmatmul.bf16.gmra.mxu0 %v328
        %v421 = vpop.f32.mrf.mxu0
        %v422 = vadd.f32 %v284, %v421
        %v423 = vpop.f32.mrf.mxu0
        %v424 = vadd.f32 %v284, %v423
        %425 = vmatmul.bf16.gmra.mxu0 %v329
        %v426 = vpop.f32.mrf.mxu0
        %v427 = vadd.f32 %v284, %v426
        %v428 = vpop.f32.mrf.mxu0
        %v429 = vadd.f32 %v284, %v428
        %430 = vmatmul.bf16.gmra.mxu0 %v330
        %v431 = vpop.f32.mrf.mxu0
        %v432 = vadd.f32 %v284, %v431
        %v433 = vpop.f32.mrf.mxu0
        %v434 = vadd.f32 %v284, %v433
        %435 = vmatmul.bf16.gmra.mxu0 %v331
        %v436 = vpop.f32.mrf.mxu0
        %v437 = vadd.f32 %v284, %v436
        %v438 = vpop.f32.mrf.mxu0
        %v439 = vadd.f32 %v284, %v438
        %440 = vmatmul.bf16.gmra.mxu0 %v332
        %v441 = vpop.f32.mrf.mxu0
        %v442 = vadd.f32 %v284, %v441
        %v443 = vpop.f32.mrf.mxu0
        %v444 = vadd.f32 %v284, %v443
        %445 = vmatmul.bf16.gmra.mxu0 %v333
        %v446 = vpop.f32.mrf.mxu0
        %v447 = vadd.f32 %v284, %v446
        %v448 = vpop.f32.mrf.mxu0
        %449 = vdwg.mxu0
        %v450 = vmax.f32 %v402, 0.0
        %v451 = vmax.f32 %v404, 0.0
        %v452 = vmax.f32 %v407, 0.0
        %v453 = vmax.f32 %v409, 0.0
        %v454 = vmax.f32 %v412, 0.0
        %v455 = vmax.f32 %v414, 0.0
        %v456 = vmax.f32 %v417, 0.0
        %v457 = vmax.f32 %v419, 0.0
        %v458 = vmax.f32 %v422, 0.0
        %v459 = vmax.f32 %v424, 0.0
        %v460 = vmax.f32 %v427, 0.0
        %v461 = vmax.f32 %v429, 0.0
        %v462 = vmax.f32 %v432, 0.0
        %v463 = vmax.f32 %v434, 0.0
        %v464 = vmax.f32 %v437, 0.0
        %v465 = vmax.f32 %v439, 0.0
        %v466 = vmax.f32 %v442, 0.0
        %v467 = vmax.f32 %v444, 0.0
        %v468 = vmax.f32 %v447, 0.0
        %vm469 = vcmask 519168
        %470 = vst.msk [vmem:[#allocation2] sm:$0xf] %vm469, %v247
        %471 = vst.msk [vmem:[#allocation2 + $0x4] sm:$0xf] %vm469, %v248
        %472 = vst.msk [vmem:[#allocation2 + $0x8] sm:$0xf] %vm469, %v249
        %473 = vst.msk [vmem:[#allocation2 + $0xc] sm:$0xf] %vm469, %v250
        %474 = vst.msk [vmem:[#allocation2 + $0x10] sm:$0xf] %vm469, %v251
        %475 = vst.msk [vmem:[#allocation2 + $0x14] sm:$0xf] %vm469, %v252
        %476 = vst.msk [vmem:[#allocation2 + $0x18] sm:$0xf] %vm469, %v253
        %477 = vst.msk [vmem:[#allocation2 + $0x1c] sm:$0xf] %vm469, %v254
        %478 = vst.msk [vmem:[#allocation2 + $0x20] sm:$0xf] %vm469, %v255
        %479 = vst.msk [vmem:[#allocation2 + $0x24] sm:$0xf] %vm469, %v256
        %480 = vst.msk [vmem:[#allocation2 + $0x28] sm:$0xf] %vm469, %v257
        %481 = vst.msk [vmem:[#allocation2 + $0x2c] sm:$0xf] %vm469, %v258
        %482 = vst.msk [vmem:[#allocation2 + $0x30] sm:$0xf] %vm469, %v259
        %483 = vst.msk [vmem:[#allocation2 + $0x34] sm:$0xf] %vm469, %v260
        %484 = vst.msk [vmem:[#allocation2 + $0x38] sm:$0xf] %vm469, %v261
        %485 = vst.msk [vmem:[#allocation2 + $0x3c] sm:$0xf] %vm469, %v262
        %486 = vst.msk [vmem:[#allocation2 + $0x40] sm:$0xf] %vm469, %v263
        %487 = vst.msk [vmem:[#allocation2 + $0x44] sm:$0xf] %vm469, %v264
        %488 = vst.msk [vmem:[#allocation2 + $0x48] sm:$0xf] %vm469, %v265
        %v489 = vpack.c.bf16 %v450, %v450
        %v490 = vpack.c.bf16 %v451, %v451
        %v491 = vpack.c.bf16 %v452, %v452
        %v492 = vpack.c.bf16 %v453, %v453
        %v493 = vpack.c.bf16 %v454, %v454
        %v494 = vpack.c.bf16 %v455, %v455
        %v495 = vpack.c.bf16 %v456, %v456
        %v496 = vpack.c.bf16 %v457, %v457
        %v497 = vpack.c.bf16 %v458, %v458
        %v498 = vpack.c.bf16 %v459, %v459
        %v499 = vpack.c.bf16 %v460, %v460
        %v500 = vpack.c.bf16 %v461, %v461
        %v501 = vpack.c.bf16 %v462, %v462
        %v502 = vpack.c.bf16 %v463, %v463
        %v503 = vpack.c.bf16 %v464, %v464
        %v504 = vpack.c.bf16 %v465, %v465
        %v505 = vpack.c.bf16 %v466, %v466
        %v506 = vpack.c.bf16 %v467, %v467
        %v507 = vpack.c.bf16 %v468, %v468
        %527 = vrot.lane.b32.xlu0 %v489, 64
        %v528 = vpop.permute.xlu0 %527
        %529 = vrot.lane.b32.xlu0 %v490, 64
        %v530 = vpop.permute.xlu0 %529
        %531 = vrot.lane.b32.xlu0 %v491, 64
        %v532 = vpop.permute.xlu0 %531
        %533 = vrot.lane.b32.xlu0 %v492, 64
        %v534 = vpop.permute.xlu0 %533
        %535 = vrot.lane.b32.xlu0 %v493, 64
        %v536 = vpop.permute.xlu0 %535
        %537 = vrot.lane.b32.xlu0 %v494, 64
        %v538 = vpop.permute.xlu0 %537
        %539 = vrot.lane.b32.xlu0 %v495, 64
        %v540 = vpop.permute.xlu0 %539
        %541 = vrot.lane.b32.xlu0 %v496, 64
        %v542 = vpop.permute.xlu0 %541
        %543 = vrot.lane.b32.xlu0 %v497, 64
        %v544 = vpop.permute.xlu0 %543
        %545 = vrot.lane.b32.xlu0 %v498, 64
        %v546 = vpop.permute.xlu0 %545
        %547 = vrot.lane.b32.xlu0 %v499, 64
        %v548 = vpop.permute.xlu0 %547
        %549 = vrot.lane.b32.xlu0 %v500, 64
        %v550 = vpop.permute.xlu0 %549
        %551 = vrot.lane.b32.xlu0 %v501, 64
        %v552 = vpop.permute.xlu0 %551
        %553 = vrot.lane.b32.xlu0 %v502, 64
        %v554 = vpop.permute.xlu0 %553
        %555 = vrot.lane.b32.xlu0 %v503, 64
        %v556 = vpop.permute.xlu0 %555
        %557 = vrot.lane.b32.xlu0 %v504, 64
        %v558 = vpop.permute.xlu0 %557
        %559 = vrot.lane.b32.xlu0 %v505, 64
        %v560 = vpop.permute.xlu0 %559
        %561 = vrot.lane.b32.xlu0 %v506, 64
        %v562 = vpop.permute.xlu0 %561
        %563 = vrot.lane.b32.xlu0 %v507, 64
        %v564 = vpop.permute.xlu0 %563
        %vm584 = vcmask 1043968
        %585 = vst.msk [vmem:[#allocation2] sm:$0xf] %vm584, %v528
        %586 = vst.msk [vmem:[#allocation2 + $0x4] sm:$0xf] %vm584, %v530
        %587 = vst.msk [vmem:[#allocation2 + $0x8] sm:$0xf] %vm584, %v532
        %588 = vst.msk [vmem:[#allocation2 + $0xc] sm:$0xf] %vm584, %v534
        %589 = vst.msk [vmem:[#allocation2 + $0x10] sm:$0xf] %vm584, %v536
        %590 = vst.msk [vmem:[#allocation2 + $0x14] sm:$0xf] %vm584, %v538
        %591 = vst.msk [vmem:[#allocation2 + $0x18] sm:$0xf] %vm584, %v540
        %592 = vst.msk [vmem:[#allocation2 + $0x1c] sm:$0xf] %vm584, %v542
        %593 = vst.msk [vmem:[#allocation2 + $0x20] sm:$0xf] %vm584, %v544
        %594 = vst.msk [vmem:[#allocation2 + $0x24] sm:$0xf] %vm584, %v546
        %595 = vst.msk [vmem:[#allocation2 + $0x28] sm:$0xf] %vm584, %v548
        %596 = vst.msk [vmem:[#allocation2 + $0x2c] sm:$0xf] %vm584, %v550
        %597 = vst.msk [vmem:[#allocation2 + $0x30] sm:$0xf] %vm584, %v552
        %598 = vst.msk [vmem:[#allocation2 + $0x34] sm:$0xf] %vm584, %v554
        %599 = vst.msk [vmem:[#allocation2 + $0x38] sm:$0xf] %vm584, %v556
        %600 = vst.msk [vmem:[#allocation2 + $0x3c] sm:$0xf] %vm584, %v558
        %601 = vst.msk [vmem:[#allocation2 + $0x40] sm:$0xf] %vm584, %v560
        %602 = vst.msk [vmem:[#allocation2 + $0x44] sm:$0xf] %vm584, %v562
        %603 = vst.msk [vmem:[#allocation2 + $0x48] sm:$0xf] %vm584, %v564
        %v604 = vld [vmem:[#allocation2] sm:$0xf]
        %v605 = vld [vmem:[#allocation2 + $0x4] sm:$0xf]
        %v606 = vld [vmem:[#allocation2 + $0x8] sm:$0xf]
        %v607 = vld [vmem:[#allocation2 + $0xc] sm:$0xf]
        %v608 = vld [vmem:[#allocation2 + $0x10] sm:$0xf]
        %v609 = vld [vmem:[#allocation2 + $0x14] sm:$0xf]
        %v610 = vld [vmem:[#allocation2 + $0x18] sm:$0xf]
        %v611 = vld [vmem:[#allocation2 + $0x1c] sm:$0xf]
        %v612 = vld [vmem:[#allocation2 + $0x20] sm:$0xf]
        %v613 = vld [vmem:[#allocation2 + $0x24] sm:$0xf]
        %v614 = vld [vmem:[#allocation2 + $0x28] sm:$0xf]
        %v615 = vld [vmem:[#allocation2 + $0x2c] sm:$0xf]
        %v616 = vld [vmem:[#allocation2 + $0x30] sm:$0xf]
        %v617 = vld [vmem:[#allocation2 + $0x34] sm:$0xf]
        %v618 = vld [vmem:[#allocation2 + $0x38] sm:$0xf]
        %v619 = vld [vmem:[#allocation2 + $0x3c] sm:$0xf]
        %v620 = vld [vmem:[#allocation2 + $0x40] sm:$0xf]
        %v621 = vld [vmem:[#allocation2 + $0x44] sm:$0xf]
        %v622 = vld [vmem:[#allocation2 + $0x48] sm:$0xf]
        %v623 = vld [vmem:[%s3] sm:$0xf]
        %v624 = vld [vmem:[%s3 + $0x4] sm:$0xf]
        %v625 = vld [vmem:[%s3 + $0x8] sm:$0xf]
        %v626 = vld [vmem:[%s3 + $0xc] sm:$0xf]
        %v627 = vld [vmem:[%s3 + $0x10] sm:$0xf]
        %v628 = vld [vmem:[%s3 + $0x14] sm:$0xf]
        %v629 = vld [vmem:[%s3 + $0x18] sm:$0xf]
        %v630 = vld [vmem:[%s3 + $0x1c] sm:$0xf]
        %v631 = vld [vmem:[%s3 + $0x20] sm:$0xf]
        %v632 = vld [vmem:[%s3 + $0x24] sm:$0xf]
        %v633 = vld [vmem:[%s3 + $0x28] sm:$0xf]
        %v634 = vld [vmem:[%s3 + $0x2c] sm:$0xf]
        %v635 = vld [vmem:[%s3 + $0x30] sm:$0xf]
        %v636 = vld [vmem:[%s3 + $0x34] sm:$0xf]
        %v637 = vld [vmem:[%s3 + $0x38] sm:$0xf]
        %v638 = vld [vmem:[%s3 + $0x3c] sm:$0xf]
        %v639 = vld [vmem:[%s4] sm:$0x1]
        %v641 = vperm.slane %v639, 0
        %v662 = vunpack.c.l.b16 %v604
        %v663 = vunpack.c.l.b16 %v605
        %v664 = vunpack.c.l.b16 %v606
        %v665 = vunpack.c.l.b16 %v607
        %v666 = vunpack.c.l.b16 %v608
        %v667 = vunpack.c.l.b16 %v609
        %v668 = vunpack.c.l.b16 %v610
        %v669 = vunpack.c.l.b16 %v611
        %v670 = vunpack.c.l.b16 %v612
        %v671 = vunpack.c.l.b16 %v613
        %v672 = vunpack.c.l.b16 %v614
        %v673 = vunpack.c.l.b16 %v615
        %v674 = vunpack.c.l.b16 %v616
        %v675 = vunpack.c.l.b16 %v617
        %v676 = vunpack.c.l.b16 %v618
        %v677 = vunpack.c.l.b16 %v619
        %v678 = vunpack.c.l.b16 %v620
        %v679 = vunpack.c.l.b16 %v621
        %v680 = vunpack.c.l.b16 %v622
        %v681 = vpack.c.b16 %v663, %v662
        %v682 = vpack.c.b16 %v665, %v664
        %v683 = vpack.c.b16 %v667, %v666
        %v684 = vpack.c.b16 %v669, %v668
        %v685 = vpack.c.b16 %v671, %v670
        %v686 = vpack.c.b16 %v673, %v672
        %v687 = vpack.c.b16 %v675, %v674
        %v688 = vpack.c.b16 %v677, %v676
        %v689 = vpack.c.b16 %v679, %v678
        %v690 = vpack.c.b16 %v680, %v680
        %v717 = vunpack.c.l.b16 %v623
        %v718 = vunpack.c.l.b16 %v624
        %v719 = vunpack.c.l.b16 %v625
        %v720 = vunpack.c.l.b16 %v626
        %v721 = vunpack.c.l.b16 %v627
        %v722 = vunpack.c.l.b16 %v628
        %v723 = vunpack.c.l.b16 %v629
        %v724 = vunpack.c.l.b16 %v630
        %v725 = vunpack.c.l.b16 %v631
        %v726 = vunpack.c.l.b16 %v632
        %v727 = vunpack.c.l.b16 %v633
        %v728 = vunpack.c.l.b16 %v634
        %v729 = vunpack.c.l.b16 %v635
        %v730 = vunpack.c.l.b16 %v636
        %v731 = vunpack.c.l.b16 %v637
        %v732 = vunpack.c.l.b16 %v638
        %v733 = vpack.c.b16 %v718, %v717
        %v734 = vpack.c.b16 %v720, %v719
        %v735 = vpack.c.b16 %v722, %v721
        %v736 = vpack.c.b16 %v724, %v723
        %v737 = vpack.c.b16 %v726, %v725
        %v738 = vpack.c.b16 %v728, %v727
        %v739 = vpack.c.b16 %v730, %v729
        %v740 = vpack.c.b16 %v732, %v731
        %749 = vmatpush.bf16.msra.mxu0 %v740
        %750 = vmatpush.bf16.msra.mxu0 %v739
        %751 = vmatpush.bf16.msra.mxu0 %v738
        %752 = vmatpush.bf16.msra.mxu0 %v737
        %753 = vmatpush.bf16.msra.mxu0 %v736
        %754 = vmatpush.bf16.msra.mxu0 %v735
        %755 = vmatpush.bf16.msra.mxu0 %v734
        %756 = vmatpush.bf16.msra.mxu0 %v733
        %757 = vmatmul.bf16.gmra.mxu0 %v681
        %v758 = vpop.f32.mrf.mxu0
        %v759 = vadd.f32 %v641, %v758
        %v760 = vpop.f32.mrf.mxu0
        %v761 = vadd.f32 %v641, %v760
        %762 = vmatmul.bf16.gmra.mxu0 %v682
        %v763 = vpop.f32.mrf.mxu0
        %v764 = vadd.f32 %v641, %v763
        %v765 = vpop.f32.mrf.mxu0
        %v766 = vadd.f32 %v641, %v765
        %767 = vmatmul.bf16.gmra.mxu0 %v683
        %v768 = vpop.f32.mrf.mxu0
        %v769 = vadd.f32 %v641, %v768
        %v770 = vpop.f32.mrf.mxu0
        %v771 = vadd.f32 %v641, %v770
        %772 = vmatmul.bf16.gmra.mxu0 %v684
        %v773 = vpop.f32.mrf.mxu0
        %v774 = vadd.f32 %v641, %v773
        %v775 = vpop.f32.mrf.mxu0
        %v776 = vadd.f32 %v641, %v775
        %777 = vmatmul.bf16.gmra.mxu0 %v685
        %v778 = vpop.f32.mrf.mxu0
        %v779 = vadd.f32 %v641, %v778
        %v780 = vpop.f32.mrf.mxu0
        %v781 = vadd.f32 %v641, %v780
        %782 = vmatmul.bf16.gmra.mxu0 %v686
        %v783 = vpop.f32.mrf.mxu0
        %v784 = vadd.f32 %v641, %v783
        %v785 = vpop.f32.mrf.mxu0
        %v786 = vadd.f32 %v641, %v785
        %787 = vmatmul.bf16.gmra.mxu0 %v687
        %v788 = vpop.f32.mrf.mxu0
        %v789 = vadd.f32 %v641, %v788
        %v790 = vpop.f32.mrf.mxu0
        %v791 = vadd.f32 %v641, %v790
        %792 = vmatmul.bf16.gmra.mxu0 %v688
        %v793 = vpop.f32.mrf.mxu0
        %v794 = vadd.f32 %v641, %v793
        %v795 = vpop.f32.mrf.mxu0
        %v796 = vadd.f32 %v641, %v795
        %797 = vmatmul.bf16.gmra.mxu0 %v689
        %v798 = vpop.f32.mrf.mxu0
        %v799 = vadd.f32 %v641, %v798
        %v800 = vpop.f32.mrf.mxu0
        %v801 = vadd.f32 %v641, %v800
        %802 = vmatmul.bf16.gmra.mxu0 %v690
        %v803 = vpop.f32.mrf.mxu0
        %v804 = vadd.f32 %v641, %v803
        %v805 = vpop.f32.mrf.mxu0
        %806 = vdwg.mxu0
        %v807 = vpack.c.bf16 %v759, %v759
        %v808 = vpack.c.bf16 %v761, %v761
        %v809 = vpack.c.bf16 %v764, %v764
        %v810 = vpack.c.bf16 %v766, %v766
        %v811 = vpack.c.bf16 %v769, %v769
        %v812 = vpack.c.bf16 %v771, %v771
        %v813 = vpack.c.bf16 %v774, %v774
        %v814 = vpack.c.bf16 %v776, %v776
        %v815 = vpack.c.bf16 %v779, %v779
        %v816 = vpack.c.bf16 %v781, %v781
        %v817 = vpack.c.bf16 %v784, %v784
        %v818 = vpack.c.bf16 %v786, %v786
        %v819 = vpack.c.bf16 %v789, %v789
        %v820 = vpack.c.bf16 %v791, %v791
        %v821 = vpack.c.bf16 %v794, %v794
        %v822 = vpack.c.bf16 %v796, %v796
        %v823 = vpack.c.bf16 %v799, %v799
        %v824 = vpack.c.bf16 %v801, %v801
        %v825 = vpack.c.bf16 %v804, %v804
        %826 = vst [vmem:[%s244] sm:$0xf] %v807
        %827 = vst [vmem:[%s244 + $0x4] sm:$0xf] %v808
        %828 = vst [vmem:[%s244 + $0x8] sm:$0xf] %v809
        %829 = vst [vmem:[%s244 + $0xc] sm:$0xf] %v810
        %830 = vst [vmem:[%s244 + $0x10] sm:$0xf] %v811
        %831 = vst [vmem:[%s244 + $0x14] sm:$0xf] %v812
        %832 = vst [vmem:[%s244 + $0x18] sm:$0xf] %v813
        %833 = vst [vmem:[%s244 + $0x1c] sm:$0xf] %v814
        %834 = vst [vmem:[%s244 + $0x20] sm:$0xf] %v815
        %835 = vst [vmem:[%s244 + $0x24] sm:$0xf] %v816
        %836 = vst [vmem:[%s244 + $0x28] sm:$0xf] %v817
        %837 = vst [vmem:[%s244 + $0x2c] sm:$0xf] %v818
        %838 = vst [vmem:[%s244 + $0x30] sm:$0xf] %v819
        %839 = vst [vmem:[%s244 + $0x34] sm:$0xf] %v820
        %840 = vst [vmem:[%s244 + $0x38] sm:$0xf] %v821
        %841 = vst [vmem:[%s244 + $0x3c] sm:$0xf] %v822
        %842 = vst [vmem:[%s244 + $0x40] sm:$0xf] %v823
        %843 = vst [vmem:[%s244 + $0x44] sm:$0xf] %v824
        %844 = vst [vmem:[%s244 + $0x48] sm:$0xf] %v825
        %s845 = sand.u32 %s140, 1
        %s846 = scalar_lea.sflag [#allocation5], %s845
        %s847 = sand.u32 %s140, 1
        %s848 = smul.addr %s847, 76
        %s849 = scalar_lea.vmem [#allocation6], %s848
        // Predicated region
        $region45: #{tpu_custom_call.1} parent=39 // pred_check
          %p850 = pneg %p150
        $region46: #{tpu_custom_call.1} parent=39 // pred_check_branch
          %852 = sbr.rel (%p850) target = $region48
        $region47: #{tpu_custom_call.1} parent=39 // pred_region
          %s853 = smul.u32 19, %s22
          %855 = vsyncadd %s846, 0
          %s856 = smul.addr %s853, 4
          %s857 = scalar_lea.hbm %s5, %s856
          %s858 = sshll.u32 %s849, 4
          %s859 = int_to_ptr.vmem [resolvable:$true] %s858
          %s860 = sshll.u32 %s857, 4
          %s861 = int_to_ptr.hbm [resolvable:$true] %s860
          %866 = dma.vmem_to_hbm [thread:$0]  %s859, 1216, %s861, %s846, 64, 64, 4
        $region48: #{tpu_custom_call.1} parent=39 // pred_fallthru
          _
      $region40: #{tpu_custom_call.1} parent=5 // pred_fallthru
        _
      %p867 = scmp.le.s32.totalorder 2, %s17
      // Predicated region
      $region49: #{tpu_custom_call.1} parent=5 // pred_check
        %p868 = pneg %p867
      $region50: #{tpu_custom_call.1} parent=5 // pred_check_branch
        %870 = sbr.rel (%p868) target = $region52
      $region51: #{tpu_custom_call.1} parent=5 // pred_region
        %s871 = ssub.s32 %s17, 2
        // Predicated region
        $region53: #{tpu_custom_call.1} parent=51 // pred_check
          %p872 = pneg %p156
        $region54: #{tpu_custom_call.1} parent=51 // pred_check_branch
          %874 = sbr.rel (%p872) target = $region56
        $region55: #{tpu_custom_call.1} parent=51 // pred_region
          %s875 = sand.u32 %s141, 1
          %s876 = scalar_lea.sflag [#allocation5], %s875
          %s877 = sand.u32 %s141, 1
          %s878 = smul.addr %s877, 76
          %s879 = scalar_lea.vmem [#allocation6], %s878
          %881 = dma.done %s876, 1216
        $region56: #{tpu_custom_call.1} parent=51 // pred_fallthru
          _
      $region52: #{tpu_custom_call.1} parent=5 // pred_fallthru
        _
    $region6: #{tpu_custom_call.1} parent=1 // loop_footer
      %s21 = sadd.s32 1, %s17
    $region7: #{tpu_custom_call.1} parent=1 // loop_footer_branch
      %16 = sbr.rel target = $region3
    $region8: #{tpu_custom_call.1} parent=1 // loop_exit
      _
    %882 = vsyncpa [#allocation4], 1
    %s883 = scalar_lea.sflag [#allocation4], 1
    %884 = vsyncpa %s883, 1
    %885 = vsyncpa [#allocation5], 1
    %s886 = scalar_lea.sflag [#allocation5], 1
    %887 = vsyncpa %s886, 1

</llo_original>
